<compile_context>
chip_gen: v5e
topology: v5e:2x2
jax: 0.10.0
libtpu: 0.0.40
codegen_flags: <defaults>
</compile_context>

<pallas_src>
import jax
import jax.numpy as jnp
from jax.experimental import pallas as pl
from jax.experimental.pallas import tpu as pltpu


def _fused_kernel(x_ref, w1d_ref, t1_ref, w2d_ref, b2_ref, o_ref):
    """binarize -> diff-matmul -> threshold ('const') -> diff-matmul + bias."""
    # Binarize input with an f32 compare on the VPU; downcast only for MXU.
    x = (x_ref[...] > 0.5).astype(jnp.bfloat16)

    # Layer 1 (folded): x @ (W1a - W1b); bias is folded into the threshold.
    h = jnp.dot(x, w1d_ref[...], preferred_element_type=jnp.float32)

    # 'const' activation with folded bias: h + colsum(W1b) > in/2  <=>  h > t1
    h = (h > t1_ref[...]).astype(jnp.bfloat16)

    # Layer 2 (folded), activation 'none': h @ (W2a - W2b) + colsum(W2b)
    o = jnp.dot(h, w2d_ref[...], preferred_element_type=jnp.float32)
    o_ref[...] = o + b2_ref[...]


def evo_binarized_mnist_forward(image, w1, w2, temperature=0.8):
    """image: (P, B, H, W) float; w1: (2, H*W, hidden); w2: (2, hidden, out)."""
    P, B, H, W = image.shape
    in_features = H * W
    hidden = w1.shape[-1]
    out_features = w2.shape[-1]
    N = P * B

    w1 = w1.astype(jnp.float32)
    w2 = w2.astype(jnp.float32)

    # ---- lane-dense padded feature dims ----
    hid_pad = 128 * max(1, pl.cdiv(hidden, 128))
    out_pad = 128 * max(1, pl.cdiv(out_features, 128))

    # ---- wrapper-side algebraic folds (exact: weights are 0/1) ----
    # Layer 1: diff matrix + bias folded into a per-column threshold.
    w1_diff = (w1[0] - w1[1]).astype(jnp.bfloat16)                 # (in, hidden), -1/0/1
    w1_diff = jnp.pad(w1_diff, ((0, 0), (0, hid_pad - hidden)))
    t1 = in_features / 2.0 - jnp.sum(w1[1], axis=0, keepdims=True)  # (1, hidden) f32
    # Padded hidden columns: dot result is 0; threshold 1.0 keeps them at 0.
    t1 = jnp.pad(t1, ((0, 0), (0, hid_pad - hidden)), constant_values=1.0)

    # Layer 2: diff matrix + bias row (padded rows/cols are zero => inert).
    w2_diff = (w2[0] - w2[1]).astype(jnp.bfloat16)                 # (hidden, out)
    w2_diff = jnp.pad(w2_diff, ((0, hid_pad - hidden), (0, out_pad - out_features)))
    b2 = jnp.sum(w2[1], axis=0, keepdims=True)                     # (1, out) f32
    b2 = jnp.pad(b2, ((0, 0), (0, out_pad - out_features)))

    # ---- row tiling over N = P*B (pad rows to the tile size) ----
    x = image.reshape(N, in_features).astype(jnp.float32)
    TM = 256
    if N < TM:
        TM = max(8, 8 * pl.cdiv(N, 8))
    N_pad = TM * pl.cdiv(N, TM)
    if N_pad != N:
        x = jnp.pad(x, ((0, N_pad - N), (0, 0)))                   # padded rows sliced off

    out = pl.pallas_call(
        _fused_kernel,
        out_shape=jax.ShapeDtypeStruct((N_pad, out_pad), jnp.float32),
        grid=(N_pad // TM,),
        in_specs=[
            pl.BlockSpec((TM, in_features), lambda i: (i, 0)),      # activations: row-tiled
            pl.BlockSpec((in_features, hid_pad), lambda i: (0, 0)),  # W1 diff: VMEM resident
            pl.BlockSpec((1, hid_pad), lambda i: (0, 0)),            # folded threshold
            pl.BlockSpec((hid_pad, out_pad), lambda i: (0, 0)),      # W2 diff (lane-dense)
            pl.BlockSpec((1, out_pad), lambda i: (0, 0)),            # b2
        ],
        out_specs=pl.BlockSpec((TM, out_pad), lambda i: (i, 0)),
        compiler_params=pltpu.CompilerParams(
            dimension_semantics=("parallel",)),                      # v7x: shard rows over TCs
    )(x, w1_diff, t1, w2_diff, b2)

    # Slice valid rows/cols, then apply temperature power only on real columns.
    out = out[:N, :out_features]
    out = jnp.power(out, jnp.float32(temperature))
    return out.reshape(P, B, out_features)


def reference_forward(image, w1, w2, temperature=0.8):
    """Pure-JAX mirror of the torch forward for correctness checking."""
    P, B, H, W = image.shape
    in_features = H * W
    x = (image.reshape(P, B, in_features) > 0.5).astype(jnp.float32)
    notx = 1.0 - x
    h = jnp.einsum("pbi,io->pbo", x, w1[0]) + jnp.einsum("pbi,io->pbo", notx, w1[1])
    h = (h > in_features / 2.0).astype(jnp.float32)
    o = jnp.einsum("pbi,io->pbo", h, w2[0]) + jnp.einsum("pbi,io->pbo", 1.0 - h, w2[1])
    return jnp.power(o, temperature)


if __name__ == "__main__":
    # Small shapes consistent with the module: population=2, batch=4,
    # spatial=16x16 -> input_size=256, hidden_size=128, output_size=10.
    P, B, H, W = 2, 4, 16, 16
    in_features = H * W
    hidden_size = 128
    output_size = 10
    temperature = 0.8

    key = jax.random.PRNGKey(0)
    k_img, k_w1, k_w2 = jax.random.split(key, 3)

    image = jax.random.uniform(k_img, (P, B, H, W), dtype=jnp.float32)
    # (torch.rand(...) > 0.5).float(): binary 0/1 weights.
    w1 = (jax.random.uniform(k_w1, (2, in_features, hidden_size)) > 0.5).astype(jnp.float32)
    w2 = (jax.random.uniform(k_w2, (2, hidden_size, output_size)) > 0.5).astype(jnp.float32)

    out = evo_binarized_mnist_forward(image, w1, w2, temperature)
    out = jax.block_until_ready(out)

    ref = reference_forward(image, w1, w2, temperature)
    assert out.shape == (P, B, output_size)
    assert jnp.allclose(out, ref, atol=1e-4, rtol=1e-4), "mismatch vs reference"

    print("KERNEL_OK")
</pallas_src>

<mosaic_0001>
module attributes {stable_mosaic.version = 11 : i64} {
  func.func @_fused_kernel(%arg0: i32, %arg1: memref<8x256xf32, #tpu.memory_space<vmem>>, %arg2: memref<256x128xbf16, #tpu.memory_space<vmem>>, %arg3: memref<1x128xf32, #tpu.memory_space<vmem>>, %arg4: memref<128x128xbf16, #tpu.memory_space<vmem>>, %arg5: memref<1x128xf32, #tpu.memory_space<vmem>>, %arg6: memref<8x128xf32, #tpu.memory_space<vmem>>) attributes {dimension_semantics = [#tpu.dimension_semantics<parallel>], iteration_bounds = array<i64: 1>, scalar_prefetch = 0 : i64, scratch_operands = 0 : i64, tpu.core_type = #tpu.core_type<tc>, window_params = [{transform_indices = @transform_0, window_bounds = array<i64: 8, 256>}, {pipeline_mode = #tpu.pipeline_mode<synchronous>, transform_indices = @transform_1, window_bounds = array<i64: 256, 128>}, {pipeline_mode = #tpu.pipeline_mode<synchronous>, transform_indices = @transform_2, window_bounds = array<i64: 1, 128>}, {pipeline_mode = #tpu.pipeline_mode<synchronous>, transform_indices = @transform_3, window_bounds = array<i64: 128, 128>}, {pipeline_mode = #tpu.pipeline_mode<synchronous>, transform_indices = @transform_4, window_bounds = array<i64: 1, 128>}, {transform_indices = @transform_5, window_bounds = array<i64: 8, 128>}]} {
    %c0 = arith.constant 0 : index
    %c0_0 = arith.constant 0 : index
    %0 = vector.load %arg1[%c0, %c0_0] : memref<8x256xf32, #tpu.memory_space<vmem>>, vector<8x256xf32>
    %cst = arith.constant 5.000000e-01 : f32
    %1 = vector.broadcast %cst : f32 to vector<8x256xf32>
    %2 = arith.cmpf ogt, %0, %1 : vector<8x256xf32>
    %3 = arith.extui %2 : vector<8x256xi1> to vector<8x256xi32>
    %4 = arith.sitofp %3 : vector<8x256xi32> to vector<8x256xf32>
    %5 = arith.truncf %4 : vector<8x256xf32> to vector<8x256xbf16>
    %c0_1 = arith.constant 0 : index
    %c0_2 = arith.constant 0 : index
    %6 = vector.load %arg2[%c0_1, %c0_2] : memref<256x128xbf16, #tpu.memory_space<vmem>>, vector<256x128xbf16>
    %cst_3 = arith.constant dense<0.000000e+00> : vector<8x128xf32>
    %7 = tpu.matmul %5, %6, %cst_3 {dimension_numbers = #tpu.dot_dimension_numbers<[1], [0], [0], [1], [0, 0, 1, 1], [], []>} : vector<8x256xbf16>, vector<256x128xbf16>, vector<8x128xf32> -> vector<8x128xf32>
    %c0_4 = arith.constant 0 : index
    %c0_5 = arith.constant 0 : index
    %8 = vector.load %arg3[%c0_4, %c0_5] : memref<1x128xf32, #tpu.memory_space<vmem>>, vector<1x128xf32>
    %9 = vector.broadcast %8 : vector<1x128xf32> to vector<8x128xf32>
    %10 = arith.cmpf ogt, %7, %9 : vector<8x128xf32>
    %11 = arith.extui %10 : vector<8x128xi1> to vector<8x128xi32>
    %12 = arith.sitofp %11 : vector<8x128xi32> to vector<8x128xf32>
    %13 = arith.truncf %12 : vector<8x128xf32> to vector<8x128xbf16>
    %c0_6 = arith.constant 0 : index
    %c0_7 = arith.constant 0 : index
    %14 = vector.load %arg4[%c0_6, %c0_7] : memref<128x128xbf16, #tpu.memory_space<vmem>>, vector<128x128xbf16>
    %cst_8 = arith.constant dense<0.000000e+00> : vector<8x128xf32>
    %15 = tpu.matmul %13, %14, %cst_8 {dimension_numbers = #tpu.dot_dimension_numbers<[1], [0], [0], [1], [0, 0, 1, 1], [], []>} : vector<8x128xbf16>, vector<128x128xbf16>, vector<8x128xf32> -> vector<8x128xf32>
    %c0_9 = arith.constant 0 : index
    %c0_10 = arith.constant 0 : index
    %16 = vector.load %arg5[%c0_9, %c0_10] : memref<1x128xf32, #tpu.memory_space<vmem>>, vector<1x128xf32>
    %17 = vector.broadcast %16 : vector<1x128xf32> to vector<8x128xf32>
    %18 = arith.addf %15, %17 : vector<8x128xf32>
    %c0_11 = arith.constant 0 : index
    %c0_12 = arith.constant 0 : index
    %19 = vector.load %arg6[%c0_11, %c0_12] : memref<8x128xf32, #tpu.memory_space<vmem>>, vector<8x128xf32>
    tpu.vector_store %arg6[%c0_11, %c0_12], %18 {strides = array<i32>} : memref<8x128xf32, #tpu.memory_space<vmem>>, vector<8x128xf32>,
    return
  }
  func.func @transform_0(%arg0: i32) -> (i32, i32) {
    %c0_i32 = arith.constant 0 : i32
    %c0_i32_0 = arith.constant 0 : i32
    return %arg0, %c0_i32 : i32, i32
  }
  func.func @transform_1(%arg0: i32) -> (i32, i32) {
    %c0_i32 = arith.constant 0 : i32
    %c0_i32_0 = arith.constant 0 : i32
    %c0_i32_1 = arith.constant 0 : i32
    return %c0_i32, %c0_i32_0 : i32, i32
  }
  func.func @transform_2(%arg0: i32) -> (i32, i32) {
    %c0_i32 = arith.constant 0 : i32
    %c0_i32_0 = arith.constant 0 : i32
    %c0_i32_1 = arith.constant 0 : i32
    return %c0_i32, %c0_i32_0 : i32, i32
  }
  func.func @transform_3(%arg0: i32) -> (i32, i32) {
    %c0_i32 = arith.constant 0 : i32
    %c0_i32_0 = arith.constant 0 : i32
    %c0_i32_1 = arith.constant 0 : i32
    return %c0_i32, %c0_i32_0 : i32, i32
  }
  func.func @transform_4(%arg0: i32) -> (i32, i32) {
    %c0_i32 = arith.constant 0 : i32
    %c0_i32_0 = arith.constant 0 : i32
    %c0_i32_1 = arith.constant 0 : i32
    return %c0_i32, %c0_i32_0 : i32, i32
  }
  func.func @transform_5(%arg0: i32) -> (i32, i32) {
    %c0_i32 = arith.constant 0 : i32
    %c0_i32_0 = arith.constant 0 : i32
    return %arg0, %c0_i32 : i32, i32
  }
}

</mosaic_0001>

<llo_original>
// kernel: tpu_custom_call.1
$region0: #{tpu_custom_call.1}
  #allocation0 [shape = 'u32[]', space=smem, size = 0x4, offset = 0x4, fixed_abs, tag = 'smem constant byte address 0x4 - core index']
  #allocation1 [shape = 'u32[72,128]{1,0:T(1,128)}', space=vmem, size = 0x9000, scoped, tag = 'internal scratch']
  %s0 = inlined_call_operand.hbm [shape: f32[8,256], index: 0, kind: input, shape index: {}]
  %s1 = inlined_call_operand.hbm [shape: bf16[256,128], index: 1, kind: input, shape index: {}]
  %s2 = inlined_call_operand.vmem [shape: f32[1,128], index: 2, kind: input, shape index: {}]
  %s3 = inlined_call_operand.hbm [shape: bf16[128,128], index: 3, kind: input, shape index: {}]
  %s4 = inlined_call_operand.vmem [shape: f32[1,128], index: 4, kind: input, shape index: {}]
  %s5 = inlined_call_operand.hbm [shape: f32[8,128], index: 5, kind: output, shape index: {}]
  %s6 = sld [smem:[#allocation0]]
  $region42: #{tpu_custom_call.1} parent=0
    _
  %s8 = ssub.s32 1, %s6
  %s9 = scalar_select 0, %s8, %s6
  $region1: #{tpu_custom_call.1} parent=0
    #allocation2 [shape = 'u8[8192]{0}', space=vmem, size = 0x2000, scoped, tag = 'input window, operand 0, single buffered']
    #allocation3 [shape = 's32[1]{0}', space=sflag, size = 0x4, scoped, tag = 'scoped memory for tpu_custom_call.1']
    #allocation4 [shape = 's32[1]{0}', space=sflag, size = 0x4, scoped, tag = 'scoped memory for tpu_custom_call.1']
    #allocation5 [shape = 'u8[65536]{0}', space=vmem, size = 0x10000, scoped, tag = 'input window, operand 1, single buffered']
    #allocation6 [shape = 's32[1]{0}', space=sflag, size = 0x4, scoped, tag = 'scoped memory for tpu_custom_call.1']
    #allocation7 [shape = 'u8[32768]{0}', space=vmem, size = 0x8000, scoped, tag = 'input window, operand 3, single buffered']
    #allocation8 [shape = 'u8[4096]{0}', space=vmem, size = 0x1000, scoped, tag = 'output window, operand 0, single buffered']
    %10 = vsyncpa [#allocation3], 0
    %11 = vsyncpa [#allocation6], 0
    %12 = vsyncpa [#allocation4], 0
    // Predicated region
    $region2: #{tpu_custom_call.1} parent=1 // pred_check
      _
    $region3: #{tpu_custom_call.1} parent=1 // pred_check_branch
      %14 = sbr.rel (0) target = $region5
    $region4: #{tpu_custom_call.1} parent=1 // pred_region
      %16 = vsyncadd [#allocation3], 0
      %s18 = sshll.u32 %s0, 4
      %s19 = int_to_ptr.hbm [resolvable:$true] %s18
      %s20 = sshll.u32 [#allocation2], 4
      %s21 = int_to_ptr.vmem [resolvable:$true] %s20
      %23 = dma.hbm_to_vmem [thread:$0]  %s19, 256, %s21, [#allocation3]
    $region5: #{tpu_custom_call.1} parent=1 // pred_fallthru
      _
    // Predicated region
    $region6: #{tpu_custom_call.1} parent=1 // pred_check
      _
    $region7: #{tpu_custom_call.1} parent=1 // pred_check_branch
      %25 = sbr.rel (0) target = $region9
    $region8: #{tpu_custom_call.1} parent=1 // pred_region
      %27 = vsyncadd [#allocation6], 0
      %s28 = sshll.u32 %s1, 4
      %s29 = int_to_ptr.hbm [resolvable:$true] %s28
      %s30 = sshll.u32 [#allocation5], 4
      %s31 = int_to_ptr.vmem [resolvable:$true] %s30
      %36 = dma.hbm_to_vmem [thread:$0]  %s29, 2048, %s31, [#allocation6], 64, 64, 4
    $region9: #{tpu_custom_call.1} parent=1 // pred_fallthru
      _
    // Predicated region
    $region10: #{tpu_custom_call.1} parent=1 // pred_check
      _
    $region11: #{tpu_custom_call.1} parent=1 // pred_check_branch
      %38 = sbr.rel (0) target = $region13
    $region12: #{tpu_custom_call.1} parent=1 // pred_region
      _
    $region13: #{tpu_custom_call.1} parent=1 // pred_fallthru
      _
    // Predicated region
    $region14: #{tpu_custom_call.1} parent=1 // pred_check
      _
    $region15: #{tpu_custom_call.1} parent=1 // pred_check_branch
      %40 = sbr.rel (0) target = $region17
    $region16: #{tpu_custom_call.1} parent=1 // pred_region
      %42 = vsyncadd [#allocation6], 0
      %s43 = sshll.u32 %s3, 4
      %s44 = int_to_ptr.hbm [resolvable:$true] %s43
      %s45 = sshll.u32 [#allocation7], 4
      %s46 = int_to_ptr.vmem [resolvable:$true] %s45
      %51 = dma.hbm_to_vmem [thread:$0]  %s44, 1024, %s46, [#allocation6], 64, 64, 4
    $region17: #{tpu_custom_call.1} parent=1 // pred_fallthru
      _
    // Predicated region
    $region18: #{tpu_custom_call.1} parent=1 // pred_check
      _
    $region19: #{tpu_custom_call.1} parent=1 // pred_check_branch
      %53 = sbr.rel (0) target = $region21
    $region20: #{tpu_custom_call.1} parent=1 // pred_region
      _
    $region21: #{tpu_custom_call.1} parent=1 // pred_fallthru
      _
    // Predicated region
    $region22: #{tpu_custom_call.1} parent=1 // pred_check
      _
    $region23: #{tpu_custom_call.1} parent=1 // pred_check_branch
      %55 = sbr.rel (0) target = $region25
    $region24: #{tpu_custom_call.1} parent=1 // pred_region
      %57 = dma.done [#allocation3], 256
    $region25: #{tpu_custom_call.1} parent=1 // pred_fallthru
      _
    // Predicated region
    $region26: #{tpu_custom_call.1} parent=1 // pred_check
      _
    $region27: #{tpu_custom_call.1} parent=1 // pred_check_branch
      %59 = sbr.rel (0) target = $region29
    $region28: #{tpu_custom_call.1} parent=1 // pred_region
      %61 = dma.done [#allocation6], 2048
    $region29: #{tpu_custom_call.1} parent=1 // pred_fallthru
      _
    // Predicated region
    $region30: #{tpu_custom_call.1} parent=1 // pred_check
      _
    $region31: #{tpu_custom_call.1} parent=1 // pred_check_branch
      %63 = sbr.rel (0) target = $region33
    $region32: #{tpu_custom_call.1} parent=1 // pred_region
      %65 = dma.done [#allocation6], 1024
    $region33: #{tpu_custom_call.1} parent=1 // pred_fallthru
      _
    %v66 = vld [vmem:[#allocation2] sm:$0xff]
    %v67 = vld [vmem:[#allocation2 + $0x8] sm:$0xff]
    %vm68 = vcmp.gt.f32.partialorder %v66, 0.5
    %vm69 = vcmp.gt.f32.partialorder %v67, 0.5
    %v70 = vsel %vm68, 1, 0
    %v71 = vsel %vm69, 1, 0
    %v72 = vcvt.s32.f32 %v70
    %v73 = vcvt.s32.f32 %v71
    %v74 = vpack.c.bf16 %v72, %v72
    %v75 = vpack.c.bf16 %v73, %v73
    %v76 = vld [vmem:[#allocation5] sm:$0xf]
    %v77 = vld [vmem:[#allocation5 + $0x4] sm:$0xf]
    %v78 = vld [vmem:[#allocation5 + $0x8] sm:$0xf]
    %v79 = vld [vmem:[#allocation5 + $0xc] sm:$0xf]
    %v80 = vld [vmem:[#allocation5 + $0x10] sm:$0xf]
    %v81 = vld [vmem:[#allocation5 + $0x14] sm:$0xf]
    %v82 = vld [vmem:[#allocation5 + $0x18] sm:$0xf]
    %v83 = vld [vmem:[#allocation5 + $0x1c] sm:$0xf]
    %v84 = vld [vmem:[#allocation5 + $0x20] sm:$0xf]
    %v85 = vld [vmem:[#allocation5 + $0x24] sm:$0xf]
    %v86 = vld [vmem:[#allocation5 + $0x28] sm:$0xf]
    %v87 = vld [vmem:[#allocation5 + $0x2c] sm:$0xf]
    %v88 = vld [vmem:[#allocation5 + $0x30] sm:$0xf]
    %v89 = vld [vmem:[#allocation5 + $0x34] sm:$0xf]
    %v90 = vld [vmem:[#allocation5 + $0x38] sm:$0xf]
    %v91 = vld [vmem:[#allocation5 + $0x3c] sm:$0xf]
    %v92 = vld [vmem:[#allocation5 + $0x40] sm:$0xf]
    %v93 = vld [vmem:[#allocation5 + $0x44] sm:$0xf]
    %v94 = vld [vmem:[#allocation5 + $0x48] sm:$0xf]
    %v95 = vld [vmem:[#allocation5 + $0x4c] sm:$0xf]
    %v96 = vld [vmem:[#allocation5 + $0x50] sm:$0xf]
    %v97 = vld [vmem:[#allocation5 + $0x54] sm:$0xf]
    %v98 = vld [vmem:[#allocation5 + $0x58] sm:$0xf]
    %v99 = vld [vmem:[#allocation5 + $0x5c] sm:$0xf]
    %v100 = vld [vmem:[#allocation5 + $0x60] sm:$0xf]
    %v101 = vld [vmem:[#allocation5 + $0x64] sm:$0xf]
    %v102 = vld [vmem:[#allocation5 + $0x68] sm:$0xf]
    %v103 = vld [vmem:[#allocation5 + $0x6c] sm:$0xf]
    %v104 = vld [vmem:[#allocation5 + $0x70] sm:$0xf]
    %v105 = vld [vmem:[#allocation5 + $0x74] sm:$0xf]
    %v106 = vld [vmem:[#allocation5 + $0x78] sm:$0xf]
    %v107 = vld [vmem:[#allocation5 + $0x7c] sm:$0xf]
    %v140 = vunpack.c.l.b16 %v76
    %v141 = vunpack.c.l.b16 %v77
    %v142 = vunpack.c.l.b16 %v78
    %v143 = vunpack.c.l.b16 %v79
    %v144 = vunpack.c.l.b16 %v80
    %v145 = vunpack.c.l.b16 %v81
    %v146 = vunpack.c.l.b16 %v82
    %v147 = vunpack.c.l.b16 %v83
    %v148 = vunpack.c.l.b16 %v84
    %v149 = vunpack.c.l.b16 %v85
    %v150 = vunpack.c.l.b16 %v86
    %v151 = vunpack.c.l.b16 %v87
    %v152 = vunpack.c.l.b16 %v88
    %v153 = vunpack.c.l.b16 %v89
    %v154 = vunpack.c.l.b16 %v90
    %v155 = vunpack.c.l.b16 %v91
    %v156 = vunpack.c.l.b16 %v92
    %v157 = vunpack.c.l.b16 %v93
    %v158 = vunpack.c.l.b16 %v94
    %v159 = vunpack.c.l.b16 %v95
    %v160 = vunpack.c.l.b16 %v96
    %v161 = vunpack.c.l.b16 %v97
    %v162 = vunpack.c.l.b16 %v98
    %v163 = vunpack.c.l.b16 %v99
    %v164 = vunpack.c.l.b16 %v100
    %v165 = vunpack.c.l.b16 %v101
    %v166 = vunpack.c.l.b16 %v102
    %v167 = vunpack.c.l.b16 %v103
    %v168 = vunpack.c.l.b16 %v104
    %v169 = vunpack.c.l.b16 %v105
    %v170 = vunpack.c.l.b16 %v106
    %v171 = vunpack.c.l.b16 %v107
    %v172 = vpack.c.b16 %v141, %v140
    %v173 = vpack.c.b16 %v143, %v142
    %v174 = vpack.c.b16 %v145, %v144
    %v175 = vpack.c.b16 %v147, %v146
    %v176 = vpack.c.b16 %v149, %v148
    %v177 = vpack.c.b16 %v151, %v150
    %v178 = vpack.c.b16 %v153, %v152
    %v179 = vpack.c.b16 %v155, %v154
    %v180 = vpack.c.b16 %v157, %v156
    %v181 = vpack.c.b16 %v159, %v158
    %v182 = vpack.c.b16 %v161, %v160
    %v183 = vpack.c.b16 %v163, %v162
    %v184 = vpack.c.b16 %v165, %v164
    %v185 = vpack.c.b16 %v167, %v166
    %v186 = vpack.c.b16 %v169, %v168
    %v187 = vpack.c.b16 %v171, %v170
    %204 = vmatpush.bf16.msra.mxu0 %v179
    %205 = vmatpush.bf16.msra.mxu0 %v178
    %206 = vmatpush.bf16.msra.mxu0 %v177
    %207 = vmatpush.bf16.msra.mxu0 %v176
    %208 = vmatpush.bf16.msra.mxu0 %v175
    %209 = vmatpush.bf16.msra.mxu0 %v174
    %210 = vmatpush.bf16.msra.mxu0 %v173
    %211 = vmatpush.bf16.msra.mxu0 %v172
    %212 = vmatmul.bf16.gmra.mxu0 %v74
    %v213 = vpop.f32.mrf.mxu0
    %v214 = vadd.f32 0.0, %v213
    %v215 = vpop.f32.mrf.mxu0
    %216 = vdwg.mxu0
    %217 = vmatpush.bf16.msra.mxu0 %v187
    %218 = vmatpush.bf16.msra.mxu0 %v186
    %219 = vmatpush.bf16.msra.mxu0 %v185
    %220 = vmatpush.bf16.msra.mxu0 %v184
    %221 = vmatpush.bf16.msra.mxu0 %v183
    %222 = vmatpush.bf16.msra.mxu0 %v182
    %223 = vmatpush.bf16.msra.mxu0 %v181
    %224 = vmatpush.bf16.msra.mxu0 %v180
    %225 = vmatmul.bf16.gmra.mxu0 %v75
    %v226 = vpop.f32.mrf.mxu0
    %v227 = vadd.f32 %v214, %v226
    %v228 = vpop.f32.mrf.mxu0
    %229 = vdwg.mxu0
    %v230 = vld [vmem:[%s2] sm:$0x1]
    %v232 = vperm.slane %v230, 0
    %vm234 = vcmp.gt.f32.partialorder %v227, %v232
    %v235 = vsel %vm234, 1, 0
    %v236 = vcvt.s32.f32 %v235
    %v237 = vpack.c.bf16 %v236, %v236
    %v238 = vld [vmem:[#allocation7] sm:$0xf]
    %v239 = vld [vmem:[#allocation7 + $0x4] sm:$0xf]
    %v240 = vld [vmem:[#allocation7 + $0x8] sm:$0xf]
    %v241 = vld [vmem:[#allocation7 + $0xc] sm:$0xf]
    %v242 = vld [vmem:[#allocation7 + $0x10] sm:$0xf]
    %v243 = vld [vmem:[#allocation7 + $0x14] sm:$0xf]
    %v244 = vld [vmem:[#allocation7 + $0x18] sm:$0xf]
    %v245 = vld [vmem:[#allocation7 + $0x1c] sm:$0xf]
    %v246 = vld [vmem:[#allocation7 + $0x20] sm:$0xf]
    %v247 = vld [vmem:[#allocation7 + $0x24] sm:$0xf]
    %v248 = vld [vmem:[#allocation7 + $0x28] sm:$0xf]
    %v249 = vld [vmem:[#allocation7 + $0x2c] sm:$0xf]
    %v250 = vld [vmem:[#allocation7 + $0x30] sm:$0xf]
    %v251 = vld [vmem:[#allocation7 + $0x34] sm:$0xf]
    %v252 = vld [vmem:[#allocation7 + $0x38] sm:$0xf]
    %v253 = vld [vmem:[#allocation7 + $0x3c] sm:$0xf]
    %v254 = vld [vmem:[%s4] sm:$0x1]
    %v256 = vperm.slane %v254, 0
    %v274 = vunpack.c.l.b16 %v238
    %v275 = vunpack.c.l.b16 %v239
    %v276 = vunpack.c.l.b16 %v240
    %v277 = vunpack.c.l.b16 %v241
    %v278 = vunpack.c.l.b16 %v242
    %v279 = vunpack.c.l.b16 %v243
    %v280 = vunpack.c.l.b16 %v244
    %v281 = vunpack.c.l.b16 %v245
    %v282 = vunpack.c.l.b16 %v246
    %v283 = vunpack.c.l.b16 %v247
    %v284 = vunpack.c.l.b16 %v248
    %v285 = vunpack.c.l.b16 %v249
    %v286 = vunpack.c.l.b16 %v250
    %v287 = vunpack.c.l.b16 %v251
    %v288 = vunpack.c.l.b16 %v252
    %v289 = vunpack.c.l.b16 %v253
    %v290 = vpack.c.b16 %v275, %v274
    %v291 = vpack.c.b16 %v277, %v276
    %v292 = vpack.c.b16 %v279, %v278
    %v293 = vpack.c.b16 %v281, %v280
    %v294 = vpack.c.b16 %v283, %v282
    %v295 = vpack.c.b16 %v285, %v284
    %v296 = vpack.c.b16 %v287, %v286
    %v297 = vpack.c.b16 %v289, %v288
    %306 = vmatpush.bf16.msra.mxu0 %v297
    %307 = vmatpush.bf16.msra.mxu0 %v296
    %308 = vmatpush.bf16.msra.mxu0 %v295
    %309 = vmatpush.bf16.msra.mxu0 %v294
    %310 = vmatpush.bf16.msra.mxu0 %v293
    %311 = vmatpush.bf16.msra.mxu0 %v292
    %312 = vmatpush.bf16.msra.mxu0 %v291
    %313 = vmatpush.bf16.msra.mxu0 %v290
    %314 = vmatmul.bf16.gmra.mxu0 %v237
    %v315 = vpop.f32.mrf.mxu0
    %v316 = vadd.f32 %v256, %v315
    %v317 = vpop.f32.mrf.mxu0
    %318 = vdwg.mxu0
    %319 = vst [vmem:[#allocation8] sm:$0xff] %v316
    // Predicated region
    $region34: #{tpu_custom_call.1} parent=1 // pred_check
      _
    $region35: #{tpu_custom_call.1} parent=1 // pred_check_branch
      %321 = sbr.rel (0) target = $region37
    $region36: #{tpu_custom_call.1} parent=1 // pred_region
      %323 = vsyncadd [#allocation4], 0
      %s325 = sshll.u32 [#allocation8], 4
      %s326 = int_to_ptr.vmem [resolvable:$true] %s325
      %s327 = sshll.u32 %s5, 4
      %s328 = int_to_ptr.hbm [resolvable:$true] %s327
      %330 = dma.vmem_to_hbm [thread:$0]  %s326, 128, %s328, [#allocation4]
    $region37: #{tpu_custom_call.1} parent=1 // pred_fallthru
      _
    // Predicated region
    $region38: #{tpu_custom_call.1} parent=1 // pred_check
      _
    $region39: #{tpu_custom_call.1} parent=1 // pred_check_branch
      %332 = sbr.rel (0) target = $region41
    $region40: #{tpu_custom_call.1} parent=1 // pred_region
      %334 = dma.done [#allocation4], 128
    $region41: #{tpu_custom_call.1} parent=1 // pred_fallthru
      _
    %335 = vsyncpa [#allocation3], 1
    %336 = vsyncpa [#allocation6], 1
    %337 = vsyncpa [#allocation4], 1

</llo_original>
